<compile_context>
chip_gen: v7x
topology: tpu7x:2x2x1
jax: 0.10.0
libtpu: 0.0.40
codegen_flags: <defaults>
</compile_context>

<pallas_src>
import jax
import jax.numpy as jnp
from jax.experimental import pallas as pl
from jax.experimental.pallas import tpu as pltpu


def _poisson_encode_kernel(seed_ref, thr_ref, o_ref):
    # seed_ref: SMEM scalar-prefetch ref, shape (1,), int32
    # thr_ref:  VMEM ref, shape (1, Np), int32 thresholds in [-1, 2^24]
    # o_ref:    VMEM ref, shape (T_BLK, Np), float32 spikes for T_BLK timesteps
    blk = pl.program_id(0)
    t_blk, n_pad = o_ref.shape

    # Global (timestep, pixel) index of every output element in this block.
    row = jax.lax.broadcasted_iota(jnp.int32, (t_blk, n_pad), 0)
    col = jax.lax.broadcasted_iota(jnp.int32, (t_blk, n_pad), 1)
    t_idx = blk * t_blk + row
    idx = (t_idx * n_pad + col).astype(jnp.uint32)

    # Counter-based stateless PRNG: lowbias32 hash of (seed, t, pixel).
    h = idx + seed_ref[0].astype(jnp.uint32) * jnp.uint32(0x9E3779B9)
    h = h ^ (h >> 16)
    h = h * jnp.uint32(0x7FEB352D)
    h = h ^ (h >> 15)
    h = h * jnp.uint32(0x846CA68B)
    h = h ^ (h >> 16)

    # Top 24 bits -> uniform integer in [0, 2^24); compare against the
    # per-pixel threshold (broadcast over the time sublanes).
    u24 = (h >> 8).astype(jnp.int32)
    o_ref[...] = (u24 <= thr_ref[...]).astype(o_ref.dtype)


def poisson_encoder_1d(img: jax.Array, T: int = 4, seed: int = 0,
                       block_t: int | None = None) -> jax.Array:
    """Poisson-encode a [C, H] image into a [T, C, H] spike train in {0, 1}."""
    assert img.ndim == 2, "expected [C, H] input"
    C, H = img.shape
    n = C * H
    n_pad = -(-n // 128) * 128                       # lane-dense last dim

    # Per-pixel integer thresholds: spike iff u24 <= floor(img * 2^24).
    #   img >= 1  -> threshold >= 2^24   -> always spikes   (rand < 1 <= img)
    #   img <  0  -> threshold = -1      -> never spikes
    x = img.astype(jnp.float32).reshape(1, n)
    thr = jnp.clip(jnp.floor(x * jnp.float32(1 << 24)),
                   -1.0, float(1 << 24)).astype(jnp.int32)
    if n_pad != n:
        thr = jnp.pad(thr, ((0, 0), (0, n_pad - n)), constant_values=-1)

    # Timestep block: multiple of 8 (f32 sublane), capped near ~2 MiB per
    # output block so double-buffering fits all VMEM generations (incl. v7x).
    if block_t is None:
        target_bytes = 2 * 1024 * 1024
        t_cap = -(-T // 8) * 8
        t_blk = (target_bytes // (n_pad * 4)) // 8 * 8
        t_blk = int(max(8, min(t_blk, t_cap)))
    else:
        t_blk = int(max(8, -(-block_t // 8) * 8))
    t_pad = -(-T // t_blk) * t_blk
    grid = (t_pad // t_blk,)

    seed_arr = jnp.array([seed], dtype=jnp.int32)

    grid_spec = pltpu.PrefetchScalarGridSpec(
        num_scalar_prefetch=1,
        grid=grid,
        in_specs=[
            # Thresholds resident in VMEM for every grid step (block == full dims).
            pl.BlockSpec((1, n_pad), lambda i, s: (0, 0)),
        ],
        out_specs=pl.BlockSpec((t_blk, n_pad), lambda i, s: (i, 0)),
    )

    out = pl.pallas_call(
        _poisson_encode_kernel,
        grid_spec=grid_spec,
        out_shape=jax.ShapeDtypeStruct((t_pad, n_pad), jnp.float32),
        compiler_params=pltpu.CompilerParams(
            dimension_semantics=("parallel",),       # independent timestep blocks
        ),
    )(seed_arr, thr)

    return out[:T, :n].reshape(T, C, H).astype(img.dtype)


if __name__ == "__main__":
    key = jax.random.PRNGKey(0)
    C, H, T = 4, 16, 4
    # Image intensities in [0, 1], like ToTensor() output.
    img = jax.random.uniform(key, (C, H), dtype=jnp.float32)

    out = jax.block_until_ready(poisson_encoder_1d(img, T=T, seed=0))
    assert out.shape == (T, C, H)
    assert out.dtype == jnp.float32
    assert bool(jnp.all((out == 0.0) | (out == 1.0)))

    # Intensity 1.0 must always spike.
    ones = jax.block_until_ready(
        poisson_encoder_1d(jnp.ones((C, H), jnp.float32), T=T, seed=7))
    assert bool(jnp.all(ones == 1.0))

    # Intensity 0.0 spikes only when the 24-bit draw is exactly 0 (~never).
    zeros = jax.block_until_ready(
        poisson_encoder_1d(jnp.zeros((C, H), jnp.float32), T=T, seed=3))
    assert float(jnp.mean(zeros)) <= 1e-3

    # Spike-rate statistics over a long train approximate the intensities.
    long_train = jax.block_until_ready(poisson_encoder_1d(img, T=512, seed=123))
    rate = jnp.mean(long_train, axis=0)
    assert float(jnp.max(jnp.abs(rate - img))) < 0.25

    # Multi-block grid path (T not a multiple of the timestep block).
    out2 = jax.block_until_ready(poisson_encoder_1d(img, T=20, seed=5, block_t=8))
    assert out2.shape == (20, C, H)
    assert bool(jnp.all((out2 == 0.0) | (out2 == 1.0)))

    print("KERNEL_OK")
</pallas_src>

<mosaic_0001>
module attributes {stable_mosaic.version = 11 : i64} {
  func.func @_poisson_encode_kernel(%arg0: i32, %arg1: memref<1xi32, #tpu.memory_space<smem>>, %arg2: memref<1x128xi32, #tpu.memory_space<vmem>>, %arg3: memref<8x128xf32, #tpu.memory_space<vmem>>) attributes {dimension_semantics = [#tpu.dimension_semantics<parallel>], iteration_bounds = array<i64: 1>, scalar_prefetch = 1 : i64, scratch_operands = 0 : i64, tpu.core_type = #tpu.core_type<tc>, window_params = [{pipeline_mode = #tpu.pipeline_mode<synchronous>, transform_indices = @transform_0, window_bounds = array<i64: 1, 128>}, {transform_indices = @transform_1, window_bounds = array<i64: 8, 128>}]} {
    %0 = tpu.iota {dimensions = array<i32: 0>} : vector<8x128xi32>
    %1 = tpu.iota {dimensions = array<i32: 1>} : vector<8x128xi32>
    %c8_i32 = arith.constant 8 : i32
    %2 = arith.muli %arg0, %c8_i32 : i32
    %3 = vector.broadcast %2 : i32 to vector<8x128xi32>
    %4 = arith.addi %3, %0 : vector<8x128xi32>
    %c128_i32 = arith.constant 128 : i32
    %5 = vector.broadcast %c128_i32 : i32 to vector<8x128xi32>
    %6 = arith.muli %4, %5 : vector<8x128xi32>
    %7 = arith.addi %6, %1 : vector<8x128xi32>
    %c0 = arith.constant 0 : index
    %8 = memref.load %arg1[%c0] : memref<1xi32, #tpu.memory_space<smem>>
    %c-1640531527_i32 = arith.constant -1640531527 : i32
    %9 = arith.muli %8, %c-1640531527_i32 : i32
    %10 = vector.broadcast %9 : i32 to vector<8x128xi32>
    %11 = arith.addi %7, %10 : vector<8x128xi32>
    %c16_i32 = arith.constant 16 : i32
    %12 = vector.broadcast %c16_i32 : i32 to vector<8x128xi32>
    %13 = arith.shrui %11, %12 : vector<8x128xi32>
    %14 = arith.xori %11, %13 : vector<8x128xi32>
    %c2146121005_i32 = arith.constant 2146121005 : i32
    %15 = vector.broadcast %c2146121005_i32 : i32 to vector<8x128xi32>
    %16 = arith.muli %14, %15 : vector<8x128xi32>
    %c15_i32 = arith.constant 15 : i32
    %17 = vector.broadcast %c15_i32 : i32 to vector<8x128xi32>
    %18 = arith.shrui %16, %17 : vector<8x128xi32>
    %19 = arith.xori %16, %18 : vector<8x128xi32>
    %c-2073254261_i32 = arith.constant -2073254261 : i32
    %20 = vector.broadcast %c-2073254261_i32 : i32 to vector<8x128xi32>
    %21 = arith.muli %19, %20 : vector<8x128xi32>
    %c16_i32_0 = arith.constant 16 : i32
    %22 = vector.broadcast %c16_i32_0 : i32 to vector<8x128xi32>
    %23 = arith.shrui %21, %22 : vector<8x128xi32>
    %24 = arith.xori %21, %23 : vector<8x128xi32>
    %c8_i32_1 = arith.constant 8 : i32
    %25 = vector.broadcast %c8_i32_1 : i32 to vector<8x128xi32>
    %26 = arith.shrui %24, %25 : vector<8x128xi32>
    %c0_2 = arith.constant 0 : index
    %c0_3 = arith.constant 0 : index
    %27 = vector.load %arg2[%c0_2, %c0_3] : memref<1x128xi32, #tpu.memory_space<vmem>>, vector<1x128xi32>
    %28 = vector.broadcast %27 : vector<1x128xi32> to vector<8x128xi32>
    %29 = arith.cmpi sle, %26, %28 : vector<8x128xi32>
    %30 = arith.extui %29 : vector<8x128xi1> to vector<8x128xi32>
    %31 = arith.sitofp %30 : vector<8x128xi32> to vector<8x128xf32>
    %c0_4 = arith.constant 0 : index
    %c0_5 = arith.constant 0 : index
    %32 = vector.load %arg3[%c0_4, %c0_5] : memref<8x128xf32, #tpu.memory_space<vmem>>, vector<8x128xf32>
    tpu.vector_store %arg3[%c0_4, %c0_5], %31 {strides = array<i32>} : memref<8x128xf32, #tpu.memory_space<vmem>>, vector<8x128xf32>,
    return
  }
  func.func @transform_0(%arg0: i32, %arg1: memref<1xi32, #tpu.memory_space<smem>>) -> (i32, i32) {
    %c0_i32 = arith.constant 0 : i32
    %c0_i32_0 = arith.constant 0 : i32
    %c0_i32_1 = arith.constant 0 : i32
    return %c0_i32, %c0_i32_0 : i32, i32
  }
  func.func @transform_1(%arg0: i32, %arg1: memref<1xi32, #tpu.memory_space<smem>>) -> (i32, i32) {
    %c0_i32 = arith.constant 0 : i32
    %c0_i32_0 = arith.constant 0 : i32
    return %arg0, %c0_i32 : i32, i32
  }
}

</mosaic_0001>

<llo_original>
// kernel: tpu_custom_call.1
$region0: #{tpu_custom_call.1}
  #allocation0 [shape = 'u32[]', space=smem, size = 0x4, offset = 0x4, fixed_abs, tag = 'smem constant byte address 0x4 - core index']
  #allocation1 [shape = 'u32[144,128]{1,0:T(1,128)}', space=vmem, size = 0x12000, scoped, tag = 'internal scratch']
  #allocation2 [shape = 's32[1]{0}', space=sflag, size = 0x4, scoped, tag = 'scoped memory for tpu_custom_call.1']
  #allocation3 [shape = 's32[1]{0:T(128)S(6)}', space=smem, size = 0x200, scoped, tag = 'prefetched SMEM operand 0']
  %s0 = inlined_call_operand.<no memory space> [shape: s32[1], index: 0, kind: input, shape index: {}]
  %s1 = inlined_call_operand.vmem [shape: s32[1,128], index: 1, kind: input, shape index: {}]
  %s2 = inlined_call_operand.hbm [shape: f32[8,128], index: 2, kind: output, shape index: {}]
  %s3 = sld [smem:[#allocation0]]
  $region14: #{tpu_custom_call.1} parent=0
    _
  %s5 = ssub.s32 1, %s3
  %s6 = scalar_select 0, %s5, %s3
  %7 = sst [smem:[#allocation3]] %s0
  $region1: #{tpu_custom_call.1} parent=0
    #allocation4 [shape = 'u8[4096]{0}', space=vmem, size = 0x1000, scoped, tag = 'output window, operand 0, single buffered']
    #allocation5 [shape = 's32[1]{0}', space=sflag, size = 0x4, scoped, tag = 'scoped memory for tpu_custom_call.1']
    %8 = vsyncpa [#allocation5], 0
    // Predicated region
    $region2: #{tpu_custom_call.1} parent=1 // pred_check
      _
    $region3: #{tpu_custom_call.1} parent=1 // pred_check_branch
      %10 = sbr.rel (0) target = $region5
    $region4: #{tpu_custom_call.1} parent=1 // pred_region
      _
    $region5: #{tpu_custom_call.1} parent=1 // pred_fallthru
      _
    %v11 = vlaneseq
    %v12 = vshrl.u32 %v11, 7
    %v13 = vlaneseq
    %v14 = vand.u32 %v13, 127
    %s15 = smul.u32 0, 8
    %v16 = vstv %s15
    %v17 = vadd.s32 %v16, %v12
    %v18 = vmul.u32 %v17, 128
    %v19 = vadd.s32 %v18, %v14
    %s20 = sld [smem:[#allocation3]]
    %s21 = smul.u32 %s20, 2654435769
    %v22 = vstv %s21
    %v23 = vadd.s32 %v19, %v22
    %v24 = vshrl.u32 %v23, 16
    %v25 = vxor.u32 %v23, %v24
    %v26 = vmul.u32 %v25, 2146121005
    %v27 = vshrl.u32 %v26, 15
    %v28 = vxor.u32 %v26, %v27
    %v29 = vmul.u32 %v28, 2221713035
    %v30 = vshrl.u32 %v29, 16
    %v31 = vxor.u32 %v29, %v30
    %v32 = vshrl.u32 %v31, 8
    %v33 = vld [vmem:[%s1] sm:$0x1]
    %v34 = vlaneseq
    %v35 = vshrl.u32 %v34, 7
    %v36 = vsub.s32 0, %v35
    %v37 = vrot.slane %v33, %v36
    %vm38 = vcmp.le.s32.totalorder %v32, %v37
    %v39 = vsel %vm38, 1, 0
    %v40 = vcvt.s32.f32 %v39
    %41 = vst [vmem:[#allocation4] sm:$0xff] %v40
    // Predicated region
    $region6: #{tpu_custom_call.1} parent=1 // pred_check
      _
    $region7: #{tpu_custom_call.1} parent=1 // pred_check_branch
      %43 = sbr.rel (0) target = $region9
    $region8: #{tpu_custom_call.1} parent=1 // pred_region
      %s45 = ssub.s32 128, 128
      %46 = vsyncadd [#allocation5], %s45
      %s48 = sshll.u32 [#allocation4], 4
      %s49 = int_to_ptr.vmem [resolvable:$true] %s48
      %51 = dma.vmem_to_hbm [thread:$0]  %s49, 128, %s2, [#allocation5]
    $region9: #{tpu_custom_call.1} parent=1 // pred_fallthru
      _
    // Predicated region
    $region10: #{tpu_custom_call.1} parent=1 // pred_check
      _
    $region11: #{tpu_custom_call.1} parent=1 // pred_check_branch
      %53 = sbr.rel (0) target = $region13
    $region12: #{tpu_custom_call.1} parent=1 // pred_region
      %54 = dma.done [#allocation5], 128
    $region13: #{tpu_custom_call.1} parent=1 // pred_fallthru
      _
    %55 = vsyncpa [#allocation5], 1

</llo_original>
